<compile_context>
chip_gen: v7x
topology: tpu7x:2x2x1
jax: 0.10.0
libtpu: 0.0.40
codegen_flags: <defaults>
</compile_context>

<pallas_src>
import functools

import jax
import jax.numpy as jnp
from jax.experimental import pallas as pl
from jax.experimental.pallas import tpu as pltpu


# ----------------------------------------------------------------------------
# Kernel body
# ----------------------------------------------------------------------------
def _olmo_mlp_kernel(x_ref, wg_ref, wu_ref, wd_ref, o_ref, acc_ref, *,
                     approx_rcp):
    i = pl.program_id(1)

    @pl.when(i == 0)
    def _init():
        acc_ref[...] = jnp.zeros_like(acc_ref)

    x = x_ref[...]                                                     # [tm, H]
    # Gate / up projections: two MXU passes over contiguous [H, ti] tiles
    # (identical MXU work to a fused [H, 2*ti] tile, two contiguous DMAs).
    gate = jnp.dot(x, wg_ref[...], preferred_element_type=jnp.float32)  # [tm, ti]
    up = jnp.dot(x, wu_ref[...], preferred_element_type=jnp.float32)    # [tm, ti]
    # Numerically-stable SiLU: clamp the exponent so exp() never overflows
    # (silu(gate) ~ 0 for gate << 0 anyway); the reciprocal therefore always
    # sees a finite input, so the approximate EUP reciprocal is safe.
    e = jnp.exp(jnp.minimum(-gate, 60.0))
    h = gate * pl.reciprocal(1.0 + e, approx=approx_rcp) * up
    # Partial down-projection for this I-tile, accumulated in f32.
    acc_ref[...] += jnp.dot(h.astype(wd_ref.dtype), wd_ref[...],
                            preferred_element_type=jnp.float32)          # [tm, H]

    @pl.when(i == pl.num_programs(1) - 1)
    def _finalize():
        o_ref[...] = acc_ref[...].astype(o_ref.dtype)


# ----------------------------------------------------------------------------
# Weight preparation (one-time, at weight-load time)
# ----------------------------------------------------------------------------
def prepare_olmo_mlp_weights(w_gate_up, w_down, *, dtype=jnp.bfloat16):
    """Re-layout PyTorch-layout OlmoMLP weights once.

    w_gate_up: [2*I, H]  MergedColumnParallelLinear weight (gate rows, up rows)
    w_down:    [H, I]    RowParallelLinear weight
    dtype:     storage dtype (bf16 by default: half the HBM weight traffic and
               full-rate MXU on v6e/v7x).

    Returns (wg [H,I], wu [H,I], wd [I,H]) -- no tile size is baked in, so the
    kernel tile `ti` can be retuned per generation without re-preparing.
    """
    two_i, H = w_gate_up.shape
    I = two_i // 2
    wg = jnp.transpose(w_gate_up[:I, :]).astype(dtype)   # [H, I]
    wu = jnp.transpose(w_gate_up[I:, :]).astype(dtype)   # [H, I]
    wd = jnp.transpose(w_down).astype(dtype)             # [I, H]
    return wg, wu, wd


# ----------------------------------------------------------------------------
# Tile / VMEM selection
# ----------------------------------------------------------------------------
def _device_kind():
    try:
        return jax.devices()[0].device_kind.lower()
    except Exception:
        return ""


def _device_vmem_cap():
    kind = _device_kind()
    if "v7" in kind:
        return 56 << 20     # v7x: 64 MiB physical per TC -> leave compiler headroom
    return 100 << 20        # v5e / v6e: 128 MiB physical VMEM


def _vmem_work(tm, ti, H, x_bytes, w_bytes):
    """Tile working set with per-array dtypes (fixes the mixed-dtype estimate)."""
    return (2 * tm * H * x_bytes          # x tiles (double-buffered)
            + 2 * tm * H * x_bytes        # output tiles (double-buffered)
            + 2 * 2 * H * ti * w_bytes    # gate + up weight tiles, double-buffered
            + 2 * ti * H * w_bytes        # down weight tiles, double-buffered
            + tm * H * 4                  # f32 accumulator scratch
            + 3 * tm * ti * 4)            # f32 gate / up / h intermediates


def _ti_candidates(I):
    """Divisors of I, preferring multiples of 256 (MXU N-dim) then 128 (lanes)."""
    for align in (256, 128):
        cands = [d for d in range(align, I + 1, align) if I % d == 0]
        if cands:
            return sorted(cands, reverse=True)
    return sorted((d for d in range(1, I + 1) if I % d == 0), reverse=True)


def _select_tiles(T, H, I, x_bytes, w_bytes, vmem_cap, tm, ti):
    kind = _device_kind()
    budget = max(vmem_cap - (8 << 20), 24 << 20)
    ti_cands = _ti_candidates(I)

    def fit_ti(tm_):
        for cand in ti_cands:
            if _vmem_work(tm_, cand, H, x_bytes, w_bytes) <= budget:
                return cand
        return None

    if tm is None:
        # Arithmetic intensity ~ tm FLOP / weight byte; knee ~650 (v6e),
        # ~620 (v7x per-TC), ~240 (v5e) -> never drop below 256, prefer 512+.
        if T >= 1024 and "v7" not in kind:
            tm_targets = (1024, 512, 256)
        elif T >= 512:
            tm_targets = (512, 256)
        else:
            tm_targets = (T,)
        tm = min(tm_targets[0], T)
        if ti is None:
            for tm_try in tm_targets:
                tm_try = min(tm_try, T)
                if fit_ti(tm_try) is not None:
                    tm = tm_try
                    break
    tm = min(tm, T)
    if tm < T:
        tm = max(8, (tm // 8) * 8)        # sublane alignment when tiling tokens
        if tm >= T:
            tm = T

    # v7x has 2 TensorCores: for decode-sized batches give the parallel token
    # axis at least two steps when T allows.
    if "v7" in kind and pl.cdiv(T, tm) == 1 and T >= 16:
        half = ((-(-T // 2)) + 7) // 8 * 8
        if half < T:
            tm = half

    if ti is None:
        ti = fit_ti(tm) or ti_cands[-1]
    ti = min(ti, I)
    assert I % ti == 0, "intermediate tile must divide intermediate_size"
    return tm, ti


# ----------------------------------------------------------------------------
# Forward wrapper
# ----------------------------------------------------------------------------
def olmo_mlp(x, wg, wu, wd, *, tm=None, ti=None, vmem_cap=None,
             approx_rcp=True):
    """Fused OlmoMLP forward: silu(x @ wg) * (x @ wu) @ wd.

    x:  [T, H] activations.
    wg: [H, I], wu: [H, I], wd: [I, H]  from prepare_olmo_mlp_weights.
    """
    T, H = x.shape
    Hg, I = wg.shape
    assert Hg == H and wu.shape == (H, I) and wd.shape == (I, H)

    x_bytes = jnp.dtype(x.dtype).itemsize
    w_bytes = jnp.dtype(wg.dtype).itemsize

    if vmem_cap is None:
        vmem_cap = _device_vmem_cap()
    tm, ti = _select_tiles(T, H, I, x_bytes, w_bytes, vmem_cap, tm, ti)

    # If T % tm != 0, Pallas pads the last token tile; padded rows compute on
    # padding but are never visible in valid output rows.
    grid = (pl.cdiv(T, tm), I // ti)

    work = _vmem_work(tm, ti, H, x_bytes, w_bytes)
    vmem_limit = max(32 << 20, min(int(work * 1.25) + (4 << 20), vmem_cap))

    cost = pl.CostEstimate(
        flops=6 * T * I * H,                           # gate + up + down matmuls
        transcendentals=T * I,                         # one exp per silu element
        bytes_accessed=int(3 * I * H * w_bytes * grid[0] + 2 * T * H * x_bytes),
    )

    kernel = functools.partial(_olmo_mlp_kernel, approx_rcp=approx_rcp)
    return pl.pallas_call(
        kernel,
        out_shape=jax.ShapeDtypeStruct((T, H), x.dtype),
        grid_spec=pltpu.PrefetchScalarGridSpec(
            num_scalar_prefetch=0,
            grid=grid,
            in_specs=[
                pl.BlockSpec((tm, H), lambda t, i: (t, 0)),   # x tile
                pl.BlockSpec((H, ti), lambda t, i: (0, i)),   # gate weight tile
                pl.BlockSpec((H, ti), lambda t, i: (0, i)),   # up weight tile
                pl.BlockSpec((ti, H), lambda t, i: (i, 0)),   # down weight tile
            ],
            out_specs=pl.BlockSpec((tm, H), lambda t, i: (t, 0)),
            scratch_shapes=[pltpu.VMEM((tm, H), jnp.float32)],
        ),
        compiler_params=pltpu.CompilerParams(
            dimension_semantics=("parallel", "arbitrary"),
            vmem_limit_bytes=vmem_limit,
        ),
        cost_estimate=cost,
    )(x, wg, wu, wd)


# ----------------------------------------------------------------------------
# Pure-JAX references
# ----------------------------------------------------------------------------
def olmo_mlp_ref(x, w_gate_up, w_down):
    gate_up = x @ w_gate_up.T
    I = w_gate_up.shape[0] // 2
    gate, up = gate_up[:, :I], gate_up[:, I:]
    return (jax.nn.silu(gate) * up) @ w_down.T


def olmo_mlp_ref_prepared(x, wg, wu, wd):
    x = x.astype(jnp.float32)
    gate = x @ wg.astype(jnp.float32)
    up = x @ wu.astype(jnp.float32)
    return (jax.nn.silu(gate) * up) @ wd.astype(jnp.float32)


# ----------------------------------------------------------------------------
# Smoke test
# ----------------------------------------------------------------------------
if __name__ == "__main__":
    # Small Olmo-like sizes; explicit tiles give grid = (2, 2), exercising
    # both the parallel token axis and the I-reduction accumulator path.
    hidden_size = 256
    intermediate_size = 512
    num_tokens = 64

    key = jax.random.PRNGKey(0)
    kx, kgu, kd = jax.random.split(key, 3)
    x = jax.random.normal(kx, (num_tokens, hidden_size), dtype=jnp.float32)
    # PyTorch Linear weight layouts (no bias), deterministic init.
    w_gate_up = jax.random.normal(
        kgu, (2 * intermediate_size, hidden_size), dtype=jnp.float32) * 0.02
    w_down = jax.random.normal(
        kd, (hidden_size, intermediate_size), dtype=jnp.float32) * 0.02

    ref = olmo_mlp_ref(x, w_gate_up, w_down)
    ref_scale = jnp.max(jnp.abs(ref)) + 1e-6

    # --- 1) f32 weights, explicit tiles, exact reciprocal: tight check -----
    wg32, wu32, wd32 = prepare_olmo_mlp_weights(w_gate_up, w_down,
                                                dtype=jnp.float32)
    out = olmo_mlp(x, wg32, wu32, wd32, tm=32, ti=256, approx_rcp=False)
    out = jax.block_until_ready(out)
    assert out.shape == (num_tokens, hidden_size)
    err = float(jnp.max(jnp.abs(out - ref)) / ref_scale)
    assert err < 1e-4, f"f32 path mismatch vs reference: rel err = {err}"

    # --- 2) bf16 weights + activations, auto tiles, approx EUP reciprocal --
    wg16, wu16, wd16 = prepare_olmo_mlp_weights(w_gate_up, w_down)  # bf16
    x16 = x.astype(jnp.bfloat16)
    out16 = olmo_mlp(x16, wg16, wu16, wd16)         # auto tm/ti/vmem selection
    out16 = jax.block_until_ready(out16)
    ref16 = olmo_mlp_ref_prepared(x16, wg16, wu16, wd16)
    err16 = float(jnp.max(jnp.abs(out16.astype(jnp.float32) - ref16))
                  / (jnp.max(jnp.abs(ref16)) + 1e-6))
    assert err16 < 2e-2, f"bf16 path mismatch vs reference: rel err = {err16}"

    print("KERNEL_OK")
</pallas_src>

<mosaic_0001>
module attributes {stable_mosaic.version = 11 : i64} {
  func.func @_olmo_mlp_kernel(%arg0: i32, %arg1: i32, %arg2: memref<32x256xf32, #tpu.memory_space<vmem>>, %arg3: memref<256x256xf32, #tpu.memory_space<vmem>>, %arg4: memref<256x256xf32, #tpu.memory_space<vmem>>, %arg5: memref<256x256xf32, #tpu.memory_space<vmem>>, %arg6: memref<32x256xf32, #tpu.memory_space<vmem>>, %arg7: memref<32x256xf32, #tpu.memory_space<vmem>>) attributes {dimension_semantics = [#tpu.dimension_semantics<parallel>, #tpu.dimension_semantics<arbitrary>], iteration_bounds = array<i64: 2, 2>, scalar_prefetch = 0 : i64, scratch_operands = 1 : i64, tpu.core_type = #tpu.core_type<tc>, window_params = [{transform_indices = @transform_0, window_bounds = array<i64: 32, 256>}, {transform_indices = @transform_1, window_bounds = array<i64: 256, 256>}, {transform_indices = @transform_2, window_bounds = array<i64: 256, 256>}, {transform_indices = @transform_3, window_bounds = array<i64: 256, 256>}, {transform_indices = @transform_4, window_bounds = array<i64: 32, 256>}]} {
    %c0_i32 = arith.constant 0 : i32
    %0 = arith.cmpi eq, %arg1, %c0_i32 : i32
    %1 = arith.extui %0 : i1 to i32
    %c0_i32_0 = arith.constant 0 : i32
    %2 = arith.cmpi ne, %1, %c0_i32_0 : i32
    scf.if %2 {
      %cst_18 = arith.constant 0.000000e+00 : f32
      %26 = vector.broadcast %cst_18 : f32 to vector<32x256xf32>
      %c0_19 = arith.constant 0 : index
      %c0_20 = arith.constant 0 : index
      %27 = vector.load %arg7[%c0_19, %c0_20] : memref<32x256xf32, #tpu.memory_space<vmem>>, vector<32x256xf32>
      tpu.vector_store %arg7[%c0_19, %c0_20], %26 {strides = array<i32>} : memref<32x256xf32, #tpu.memory_space<vmem>>, vector<32x256xf32>,
    } else {
    }
    %c0 = arith.constant 0 : index
    %c0_1 = arith.constant 0 : index
    %3 = vector.load %arg2[%c0, %c0_1] : memref<32x256xf32, #tpu.memory_space<vmem>>, vector<32x256xf32>
    %c0_2 = arith.constant 0 : index
    %c0_3 = arith.constant 0 : index
    %4 = vector.load %arg3[%c0_2, %c0_3] : memref<256x256xf32, #tpu.memory_space<vmem>>, vector<256x256xf32>
    %cst = arith.constant dense<0.000000e+00> : vector<32x256xf32>
    %5 = tpu.matmul %3, %4, %cst {dimension_numbers = #tpu.dot_dimension_numbers<[1], [0], [0], [1], [0, 0, 1, 1], [], []>} : vector<32x256xf32>, vector<256x256xf32>, vector<32x256xf32> -> vector<32x256xf32>
    %c0_4 = arith.constant 0 : index
    %c0_5 = arith.constant 0 : index
    %6 = vector.load %arg4[%c0_4, %c0_5] : memref<256x256xf32, #tpu.memory_space<vmem>>, vector<256x256xf32>
    %cst_6 = arith.constant dense<0.000000e+00> : vector<32x256xf32>
    %7 = tpu.matmul %3, %6, %cst_6 {dimension_numbers = #tpu.dot_dimension_numbers<[1], [0], [0], [1], [0, 0, 1, 1], [], []>} : vector<32x256xf32>, vector<256x256xf32>, vector<32x256xf32> -> vector<32x256xf32>
    %cst_7 = arith.constant 0.000000e+00 : f32
    %8 = vector.broadcast %cst_7 : f32 to vector<32x256xf32>
    %9 = arith.subf %8, %5 : vector<32x256xf32>
    %cst_8 = arith.constant 6.000000e+01 : f32
    %10 = vector.broadcast %cst_8 : f32 to vector<32x256xf32>
    %11 = arith.minimumf %9, %10 : vector<32x256xf32>
    %12 = math.exp %11 : vector<32x256xf32>
    %cst_9 = arith.constant 1.000000e+00 : f32
    %13 = vector.broadcast %cst_9 : f32 to vector<32x256xf32>
    %14 = arith.addf %13, %12 : vector<32x256xf32>
    %15 = tpu.reciprocal %14 : vector<32x256xf32> -> vector<32x256xf32>
    %16 = arith.mulf %5, %15 : vector<32x256xf32>
    %17 = arith.mulf %16, %7 : vector<32x256xf32>
    %c0_10 = arith.constant 0 : index
    %c0_11 = arith.constant 0 : index
    %18 = vector.load %arg7[%c0_10, %c0_11] : memref<32x256xf32, #tpu.memory_space<vmem>>, vector<32x256xf32>
    %c0_12 = arith.constant 0 : index
    %c0_13 = arith.constant 0 : index
    %19 = vector.load %arg5[%c0_12, %c0_13] : memref<256x256xf32, #tpu.memory_space<vmem>>, vector<256x256xf32>
    %cst_14 = arith.constant dense<0.000000e+00> : vector<32x256xf32>
    %20 = tpu.matmul %17, %19, %cst_14 {dimension_numbers = #tpu.dot_dimension_numbers<[1], [0], [0], [1], [0, 0, 1, 1], [], []>} : vector<32x256xf32>, vector<256x256xf32>, vector<32x256xf32> -> vector<32x256xf32>
    %21 = arith.addf %18, %20 : vector<32x256xf32>
    %c0_15 = arith.constant 0 : index
    %c0_16 = arith.constant 0 : index
    %22 = vector.load %arg7[%c0_15, %c0_16] : memref<32x256xf32, #tpu.memory_space<vmem>>, vector<32x256xf32>
    tpu.vector_store %arg7[%c0_15, %c0_16], %21 {strides = array<i32>} : memref<32x256xf32, #tpu.memory_space<vmem>>, vector<32x256xf32>,
    %c1_i32 = arith.constant 1 : i32
    %23 = arith.cmpi eq, %arg1, %c1_i32 : i32
    %24 = arith.extui %23 : i1 to i32
    %c0_i32_17 = arith.constant 0 : i32
    %25 = arith.cmpi ne, %24, %c0_i32_17 : i32
    scf.if %25 {
      %c0_18 = arith.constant 0 : index
      %c0_19 = arith.constant 0 : index
      %26 = vector.load %arg7[%c0_18, %c0_19] : memref<32x256xf32, #tpu.memory_space<vmem>>, vector<32x256xf32>
      %c0_20 = arith.constant 0 : index
      %c0_21 = arith.constant 0 : index
      %27 = vector.load %arg6[%c0_20, %c0_21] : memref<32x256xf32, #tpu.memory_space<vmem>>, vector<32x256xf32>
      tpu.vector_store %arg6[%c0_20, %c0_21], %26 {strides = array<i32>} : memref<32x256xf32, #tpu.memory_space<vmem>>, vector<32x256xf32>,
    } else {
    }
    return
  }
  func.func @transform_0(%arg0: i32, %arg1: i32) -> (i32, i32) {
    %c0_i32 = arith.constant 0 : i32
    %c0_i32_0 = arith.constant 0 : i32
    return %arg0, %c0_i32 : i32, i32
  }
  func.func @transform_1(%arg0: i32, %arg1: i32) -> (i32, i32) {
    %c0_i32 = arith.constant 0 : i32
    %c0_i32_0 = arith.constant 0 : i32
    return %c0_i32, %arg1 : i32, i32
  }
  func.func @transform_2(%arg0: i32, %arg1: i32) -> (i32, i32) {
    %c0_i32 = arith.constant 0 : i32
    %c0_i32_0 = arith.constant 0 : i32
    return %c0_i32, %arg1 : i32, i32
  }
  func.func @transform_3(%arg0: i32, %arg1: i32) -> (i32, i32) {
    %c0_i32 = arith.constant 0 : i32
    %c0_i32_0 = arith.constant 0 : i32
    return %arg1, %c0_i32 : i32, i32
  }
  func.func @transform_4(%arg0: i32, %arg1: i32) -> (i32, i32) {
    %c0_i32 = arith.constant 0 : i32
    %c0_i32_0 = arith.constant 0 : i32
    return %arg0, %c0_i32 : i32, i32
  }
}

</mosaic_0001>

<llo_original>
// kernel: tpu_custom_call.1
$region0: #{tpu_custom_call.1}
  #allocation0 [shape = 'u32[]', space=smem, size = 0x4, offset = 0x4, fixed_abs, tag = 'smem constant byte address 0x4 - core index']
  #allocation1 [shape = 'u32[144,128]{1,0:T(1,128)}', space=vmem, size = 0x12000, scoped, tag = 'internal scratch']
  #allocation2 [shape = 'f32[32,256]{1,0:T(8,128)}', space=vmem, size = 0x8000, scoped, tag = 'scratch operand']
  %s0 = inlined_call_operand.hbm [shape: f32[64,256], index: 0, kind: input, shape index: {}]
  %s1 = inlined_call_operand.hbm [shape: f32[256,512], index: 1, kind: input, shape index: {}]
  %s2 = inlined_call_operand.hbm [shape: f32[256,512], index: 2, kind: input, shape index: {}]
  %s3 = inlined_call_operand.hbm [shape: f32[512,256], index: 3, kind: input, shape index: {}]
  %s4 = inlined_call_operand.hbm [shape: f32[64,256], index: 4, kind: output, shape index: {}]
  %s5 = sld [smem:[#allocation0]]
  $region73: #{tpu_custom_call.1} parent=0
    _
  %s7 = ssub.s32 1, %s5
  %s8 = scalar_select 0, %s7, %s5
  $region1: #{tpu_custom_call.1} parent=0
    #allocation3 [shape = 'u8[65536]{0}', space=vmem, size = 0x10000, scoped, tag = 'input window, operand 0']
    #allocation4 [shape = 's32[2]{0}', space=sflag, size = 0x8, scoped, tag = 'scoped memory for tpu_custom_call.1']
    #allocation5 [shape = 's32[2]{0}', space=sflag, size = 0x8, scoped, tag = 'scoped memory for tpu_custom_call.1']
    #allocation6 [shape = 'u8[524288]{0}', space=vmem, size = 0x80000, scoped, tag = 'input window, operand 1']
    #allocation7 [shape = 's32[2]{0}', space=sflag, size = 0x8, scoped, tag = 'scoped memory for tpu_custom_call.1']
    #allocation8 [shape = 'u8[524288]{0}', space=vmem, size = 0x80000, scoped, tag = 'input window, operand 2']
    #allocation9 [shape = 'u8[524288]{0}', space=vmem, size = 0x80000, scoped, tag = 'input window, operand 3']
    #allocation10 [shape = 's32[2]{0}', space=sflag, size = 0x8, scoped, tag = 'scoped memory for tpu_custom_call.1']
    #allocation11 [shape = 'u8[65536]{0}', space=vmem, size = 0x10000, scoped, tag = 'output window, operand 0']
    %9 = vsyncpa [#allocation4], 0
    %s10 = scalar_lea.sflag [#allocation4], 1
    %11 = vsyncpa %s10, 0
    %12 = vsyncpa [#allocation7], 0
    %s13 = scalar_lea.sflag [#allocation7], 1
    %14 = vsyncpa %s13, 0
    %15 = vsyncpa [#allocation10], 0
    %s16 = scalar_lea.sflag [#allocation10], 1
    %17 = vsyncpa %s16, 0
    %18 = vsyncpa [#allocation5], 0
    %s19 = scalar_lea.sflag [#allocation5], 1
    %20 = vsyncpa %s19, 0
    loop: start=0, step=1, limit=6
    $region2: #{tpu_custom_call.1} parent=1 // loop_pre_header
      _
    $region3: #{tpu_custom_call.1} parent=1 // loop_header
      %s22 = sphi 0, %s26
      %p23 = scmp.ge.s32.totalorder %s22, 6
      %s29 = sphi 0, %s41
      %s30 = sphi 0, %s37
      %s31 = sphi 0, %s29
      %s32 = sphi 0, %s30
      %s33 = sphi 0, %s31
      %s34 = sphi 0, %s32
      %s44 = sphi 0, %s46
      %s47 = sphi 0, %s44
      %s48 = sphi 0, %s47
      %s64 = sphi 0, %s48
      %s70 = sphi 0, %s72
      %s73 = sphi 0, %s70
      %s74 = sphi 0, %s73
      %s90 = sphi 0, %s74
      %s96 = sphi 0, %s98
      %s99 = sphi 0, %s96
      %s100 = sphi 0, %s99
      %s116 = sphi 0, %s100
      %s122 = sphi 0, %s124
      %s125 = sphi 0, %s122
      %s126 = sphi 0, %s125
      %s142 = sphi 0, %s126
      %s148 = sphi 0, %s150
      %s151 = sphi 0, %s148
      %s152 = sphi 0, %s151
      %s168 = sphi 0, %s152
    $region4: #{tpu_custom_call.1} parent=1 // loop_header_branch
      %25 = sbr.rel (%p23) target = $region8
    $region5: #{tpu_custom_call.1} parent=1 // loop_body
      %s27 = ssub.s32 %s22, 1
      %s28 = ssub.s32 %s22, 2
      %s35 = sadd.s32 1, %s30
      %p36 = scmp.ge.s32.totalorder %s35, 2
      %s37 = scalar_select %p36, 0, %s35
      %s38 = sadd.s32 1, %s29
      %s39 = scalar_select %p36, %s38, %s29
      %p40 = scmp.ge.s32.totalorder %s39, 2
      %s41 = scalar_select %p40, 0, %s39
      %s42 = ssub.s32 %s29, %s41
      %p43 = scmp.eq.s32.totalorder %s42, 0
      %s45 = sadd.s32 %s44, 1
      %s46 = scalar_select %p43, %s44, %s45
      %p49 = pneg %p43
      %p50 = scmp.eq.s32.totalorder %s22, 3
      %p51 = por %p49, %p50
      %p52 = scmp.ne.s32.totalorder %s44, %s47
      %p53 = scmp.eq.s32.totalorder %s22, 0
      %p54 = por %p52, %p53
      %p55 = scmp.ne.s32.totalorder %s44, %s47
      %p56 = scmp.eq.s32.totalorder %s27, 3
      %p57 = por %p55, %p56
      %p58 = scmp.ne.s32.totalorder %s47, %s48
      %p59 = scmp.eq.s32.totalorder %s27, 0
      %p60 = por %p58, %p59
      %p61 = scmp.ne.s32.totalorder %s47, %s48
      %p62 = scmp.eq.s32.totalorder %s28, 3
      %p63 = por %p61, %p62
      %p65 = scmp.ne.s32.totalorder %s48, %s64
      %p66 = scmp.eq.s32.totalorder %s28, 0
      %p67 = por %p65, %p66
      %s68 = ssub.s32 %s30, %s37
      %p69 = scmp.eq.s32.totalorder %s68, 0
      %s71 = sadd.s32 %s70, 1
      %s72 = scalar_select %p69, %s70, %s71
      %p75 = pneg %p69
      %p76 = scmp.eq.s32.totalorder %s22, 3
      %p77 = por %p75, %p76
      %p78 = scmp.ne.s32.totalorder %s70, %s73
      %p79 = scmp.eq.s32.totalorder %s22, 0
      %p80 = por %p78, %p79
      %p81 = scmp.ne.s32.totalorder %s70, %s73
      %p82 = scmp.eq.s32.totalorder %s27, 3
      %p83 = por %p81, %p82
      %p84 = scmp.ne.s32.totalorder %s73, %s74
      %p85 = scmp.eq.s32.totalorder %s27, 0
      %p86 = por %p84, %p85
      %p87 = scmp.ne.s32.totalorder %s73, %s74
      %p88 = scmp.eq.s32.totalorder %s28, 3
      %p89 = por %p87, %p88
      %p91 = scmp.ne.s32.totalorder %s74, %s90
      %p92 = scmp.eq.s32.totalorder %s28, 0
      %p93 = por %p91, %p92
      %s94 = ssub.s32 %s30, %s37
      %p95 = scmp.eq.s32.totalorder %s94, 0
      %s97 = sadd.s32 %s96, 1
      %s98 = scalar_select %p95, %s96, %s97
      %p101 = pneg %p95
      %p102 = scmp.eq.s32.totalorder %s22, 3
      %p103 = por %p101, %p102
      %p104 = scmp.ne.s32.totalorder %s96, %s99
      %p105 = scmp.eq.s32.totalorder %s22, 0
      %p106 = por %p104, %p105
      %p107 = scmp.ne.s32.totalorder %s96, %s99
      %p108 = scmp.eq.s32.totalorder %s27, 3
      %p109 = por %p107, %p108
      %p110 = scmp.ne.s32.totalorder %s99, %s100
      %p111 = scmp.eq.s32.totalorder %s27, 0
      %p112 = por %p110, %p111
      %p113 = scmp.ne.s32.totalorder %s99, %s100
      %p114 = scmp.eq.s32.totalorder %s28, 3
      %p115 = por %p113, %p114
      %p117 = scmp.ne.s32.totalorder %s100, %s116
      %p118 = scmp.eq.s32.totalorder %s28, 0
      %p119 = por %p117, %p118
      %s120 = ssub.s32 %s30, %s37
      %p121 = scmp.eq.s32.totalorder %s120, 0
      %s123 = sadd.s32 %s122, 1
      %s124 = scalar_select %p121, %s122, %s123
      %p127 = pneg %p121
      %p128 = scmp.eq.s32.totalorder %s22, 3
      %p129 = por %p127, %p128
      %p130 = scmp.ne.s32.totalorder %s122, %s125
      %p131 = scmp.eq.s32.totalorder %s22, 0
      %p132 = por %p130, %p131
      %p133 = scmp.ne.s32.totalorder %s122, %s125
      %p134 = scmp.eq.s32.totalorder %s27, 3
      %p135 = por %p133, %p134
      %p136 = scmp.ne.s32.totalorder %s125, %s126
      %p137 = scmp.eq.s32.totalorder %s27, 0
      %p138 = por %p136, %p137
      %p139 = scmp.ne.s32.totalorder %s125, %s126
      %p140 = scmp.eq.s32.totalorder %s28, 3
      %p141 = por %p139, %p140
      %p143 = scmp.ne.s32.totalorder %s126, %s142
      %p144 = scmp.eq.s32.totalorder %s28, 0
      %p145 = por %p143, %p144
      %s146 = ssub.s32 %s29, %s41
      %p147 = scmp.eq.s32.totalorder %s146, 0
      %s149 = sadd.s32 %s148, 1
      %s150 = scalar_select %p147, %s148, %s149
      %p153 = pneg %p147
      %p154 = scmp.eq.s32.totalorder %s22, 3
      %p155 = por %p153, %p154
      %p156 = scmp.ne.s32.totalorder %s148, %s151
      %p157 = scmp.eq.s32.totalorder %s22, 0
      %p158 = por %p156, %p157
      %p159 = scmp.ne.s32.totalorder %s148, %s151
      %p160 = scmp.eq.s32.totalorder %s27, 3
      %p161 = por %p159, %p160
      %p162 = scmp.ne.s32.totalorder %s151, %s152
      %p163 = scmp.eq.s32.totalorder %s27, 0
      %p164 = por %p162, %p163
      %p165 = scmp.ne.s32.totalorder %s151, %s152
      %p166 = scmp.eq.s32.totalorder %s28, 3
      %p167 = por %p165, %p166
      %p169 = scmp.ne.s32.totalorder %s152, %s168
      %p170 = scmp.eq.s32.totalorder %s28, 0
      %p171 = por %p169, %p170
      %p172 = scmp.le.s32.totalorder 1, %s22
      %p173 = scmp.lt.s32.totalorder %s22, 5
      %p174 = pnand %p172, %p173
      %p175 = pneg %p174
      // Predicated region
      $region9: #{tpu_custom_call.1} parent=5 // pred_check
        _
      $region10: #{tpu_custom_call.1} parent=5 // pred_check_branch
        %177 = sbr.rel (%p174) target = $region12
      $region11: #{tpu_custom_call.1} parent=5 // pred_region
        %s178 = ssub.s32 %s22, 1
      $region12: #{tpu_custom_call.1} parent=5 // pred_fallthru
        _
      %p179 = scmp.lt.s32.totalorder %s22, 4
      // Predicated region
      $region13: #{tpu_custom_call.1} parent=5 // pred_check
        %p180 = pneg %p179
      $region14: #{tpu_custom_call.1} parent=5 // pred_check_branch
        %182 = sbr.rel (%p180) target = $region16
      $region15: #{tpu_custom_call.1} parent=5 // pred_region
        // Predicated region
        $region17: #{tpu_custom_call.1} parent=15 // pred_check
          %p183 = pneg %p54
        $region18: #{tpu_custom_call.1} parent=15 // pred_check_branch
          %185 = sbr.rel (%p183) target = $region20
        $region19: #{tpu_custom_call.1} parent=15 // pred_region
          %s186 = sand.u32 %s44, 1
          %s187 = scalar_lea.sflag [#allocation4], %s186
          %s188 = sand.u32 %s44, 1
          %s189 = smul.addr %s188, 64
          %s190 = scalar_lea.vmem [#allocation3], %s189
          %s191 = smul.u32 4, %s29
          %s193 = ssub.s32 1024, 1024
          %194 = vsyncadd %s187, %s193
          %s195 = smul.addr %s191, 2
          %s196 = smul.addr %s195, 128
          %s197 = scalar_lea.hbm %s0, %s196
          %s198 = sshll.u32 %s190, 4
          %s199 = int_to_ptr.vmem [resolvable:$true] %s198
          %204 = dma.hbm_to_vmem [thread:$0]  %s197, 1024, %s199, %s187, 256, 256, 16
        $region20: #{tpu_custom_call.1} parent=15 // pred_fallthru
          _
        // Predicated region
        $region21: #{tpu_custom_call.1} parent=15 // pred_check
          %p205 = pneg %p80
        $region22: #{tpu_custom_call.1} parent=15 // pred_check_branch
          %207 = sbr.rel (%p205) target = $region24
        $region23: #{tpu_custom_call.1} parent=15 // pred_region
          %s208 = sand.u32 %s22, 1
          %s209 = scalar_lea.sflag [#allocation7], %s208
          %s210 = sand.u32 %s70, 1
          %s211 = smul.addr %s210, 512
          %s212 = scalar_lea.vmem [#allocation6], %s211
          %s213 = smul.u32 2, %s30
          %s215 = ssub.s32 8192, 8192
          %216 = vsyncadd %s209, %s215
          %s217 = smul.addr %s213, 128
          %s218 = scalar_lea.hbm %s1, %s217
          %s219 = sshll.u32 %s212, 4
          %s220 = int_to_ptr.vmem [resolvable:$true] %s219
          %225 = dma.hbm_to_vmem [thread:$0]  %s218, 8192, %s220, %s209, 512, 256, 16
        $region24: #{tpu_custom_call.1} parent=15 // pred_fallthru
          _
        // Predicated region
        $region25: #{tpu_custom_call.1} parent=15 // pred_check
          %p226 = pneg %p106
        $region26: #{tpu_custom_call.1} parent=15 // pred_check_branch
          %228 = sbr.rel (%p226) target = $region28
        $region27: #{tpu_custom_call.1} parent=15 // pred_region
          %s229 = sand.u32 %s22, 1
          %s230 = scalar_lea.sflag [#allocation7], %s229
          %s231 = sand.u32 %s96, 1
          %s232 = smul.addr %s231, 512
          %s233 = scalar_lea.vmem [#allocation8], %s232
          %s234 = smul.u32 2, %s30
          %s236 = ssub.s32 8192, 8192
          %237 = vsyncadd %s230, %s236
          %s238 = smul.addr %s234, 128
          %s239 = scalar_lea.hbm %s2, %s238
          %s240 = sshll.u32 %s233, 4
          %s241 = int_to_ptr.vmem [resolvable:$true] %s240
          %246 = dma.hbm_to_vmem [thread:$0]  %s239, 8192, %s241, %s230, 512, 256, 16
        $region28: #{tpu_custom_call.1} parent=15 // pred_fallthru
          _
        // Predicated region
        $region29: #{tpu_custom_call.1} parent=15 // pred_check
          %p247 = pneg %p132
        $region30: #{tpu_custom_call.1} parent=15 // pred_check_branch
          %249 = sbr.rel (%p247) target = $region32
        $region31: #{tpu_custom_call.1} parent=15 // pred_region
          %s250 = sand.u32 %s122, 1
          %s251 = scalar_lea.sflag [#allocation10], %s250
          %s252 = sand.u32 %s122, 1
          %s253 = smul.addr %s252, 512
          %s254 = scalar_lea.vmem [#allocation9], %s253
          %s255 = smul.u32 32, %s30
          %s257 = ssub.s32 8192, 8192
          %258 = vsyncadd %s251, %s257
          %s259 = smul.addr %s255, 2
          %s260 = smul.addr %s259, 128
          %s261 = scalar_lea.hbm %s3, %s260
          %s262 = sshll.u32 %s254, 4
          %s263 = int_to_ptr.vmem [resolvable:$true] %s262
          %268 = dma.hbm_to_vmem [thread:$0]  %s261, 8192, %s263, %s251, 256, 256, 16
        $region32: #{tpu_custom_call.1} parent=15 // pred_fallthru
          _
      $region16: #{tpu_custom_call.1} parent=5 // pred_fallthru
        _
      %p269 = scmp.le.s32.totalorder 1, %s22
      %p270 = scmp.lt.s32.totalorder %s22, 5
      %p271 = pnand %p269, %p270
      %p272 = pneg %p271
      // Predicated region
      $region33: #{tpu_custom_call.1} parent=5 // pred_check
        _
      $region34: #{tpu_custom_call.1} parent=5 // pred_check_branch
        %274 = sbr.rel (%p271) target = $region36
      $region35: #{tpu_custom_call.1} parent=5 // pred_region
        %s275 = ssub.s32 %s22, 1
        %s276 = sand.u32 %s47, 1
        %s277 = scalar_lea.sflag [#allocation4], %s276
        %s278 = sand.u32 %s47, 1
        %s279 = smul.addr %s278, 64
        %s280 = scalar_lea.vmem [#allocation3], %s279
        // Predicated region
        $region37: #{tpu_custom_call.1} parent=35 // pred_check
          %p281 = pneg %p60
        $region38: #{tpu_custom_call.1} parent=35 // pred_check_branch
          %283 = sbr.rel (%p281) target = $region40
        $region39: #{tpu_custom_call.1} parent=35 // pred_region
          %284 = dma.done %s277, 1024
        $region40: #{tpu_custom_call.1} parent=35 // pred_fallthru
          _
        %s285 = sand.u32 %s27, 1
        %s286 = scalar_lea.sflag [#allocation7], %s285
        %s287 = sand.u32 %s73, 1
        %s288 = smul.addr %s287, 512
        %s289 = scalar_lea.vmem [#allocation6], %s288
        // Predicated region
        $region41: #{tpu_custom_call.1} parent=35 // pred_check
          %p290 = pneg %p86
        $region42: #{tpu_custom_call.1} parent=35 // pred_check_branch
          %292 = sbr.rel (%p290) target = $region44
        $region43: #{tpu_custom_call.1} parent=35 // pred_region
          %293 = dma.done %s286, 8192
        $region44: #{tpu_custom_call.1} parent=35 // pred_fallthru
          _
        %s294 = sand.u32 %s27, 1
        %s295 = scalar_lea.sflag [#allocation7], %s294
        %s296 = sand.u32 %s99, 1
        %s297 = smul.addr %s296, 512
        %s298 = scalar_lea.vmem [#allocation8], %s297
        // Predicated region
        $region45: #{tpu_custom_call.1} parent=35 // pred_check
          %p299 = pneg %p112
        $region46: #{tpu_custom_call.1} parent=35 // pred_check_branch
          %301 = sbr.rel (%p299) target = $region48
        $region47: #{tpu_custom_call.1} parent=35 // pred_region
          %302 = dma.done %s295, 8192
        $region48: #{tpu_custom_call.1} parent=35 // pred_fallthru
          _
        %s303 = sand.u32 %s125, 1
        %s304 = scalar_lea.sflag [#allocation10], %s303
        %s305 = sand.u32 %s125, 1
        %s306 = smul.addr %s305, 512
        %s307 = scalar_lea.vmem [#allocation9], %s306
        // Predicated region
        $region49: #{tpu_custom_call.1} parent=35 // pred_check
          %p308 = pneg %p138
        $region50: #{tpu_custom_call.1} parent=35 // pred_check_branch
          %310 = sbr.rel (%p308) target = $region52
        $region51: #{tpu_custom_call.1} parent=35 // pred_region
          %311 = dma.done %s304, 8192
        $region52: #{tpu_custom_call.1} parent=35 // pred_fallthru
          _
        %s312 = sand.u32 %s47, 1
        %s313 = scalar_lea.sflag [#allocation4], %s312
        %s314 = sand.u32 %s47, 1
        %s315 = smul.addr %s314, 64
        %s316 = scalar_lea.vmem [#allocation3], %s315
        %p317 = pneg %p60
        %p318 = pneg %p57
        %s319 = sand.u32 %s27, 1
        %s320 = scalar_lea.sflag [#allocation7], %s319
        %s321 = sand.u32 %s73, 1
        %s322 = smul.addr %s321, 512
        %s323 = scalar_lea.vmem [#allocation6], %s322
        %p324 = pneg %p86
        %p325 = pneg %p83
        %s326 = sand.u32 %s27, 1
        %s327 = scalar_lea.sflag [#allocation7], %s326
        %s328 = sand.u32 %s99, 1
        %s329 = smul.addr %s328, 512
        %s330 = scalar_lea.vmem [#allocation8], %s329
        %p331 = pneg %p112
        %p332 = pneg %p109
        %s333 = sand.u32 %s125, 1
        %s334 = scalar_lea.sflag [#allocation10], %s333
        %s335 = sand.u32 %s125, 1
        %s336 = smul.addr %s335, 512
        %s337 = scalar_lea.vmem [#allocation9], %s336
        %p338 = pneg %p138
        %p339 = pneg %p135
        %p340 = pneg %p164
        %p341 = pneg %p161
        %s342 = sand.u32 %s151, 1
        %s343 = scalar_lea.sflag [#allocation5], %s342
        %s344 = sand.u32 %s151, 1
        %s345 = smul.addr %s344, 64
        %s346 = scalar_lea.vmem [#allocation11], %s345
        %s347 = smul.u32 4, %s31
        %s348 = smul.u32 2, %s32
        %s349 = smul.u32 2, %s32
        %s350 = smul.u32 32, %s32
        %s351 = smul.u32 4, %s31
        %p352 = scmp.eq.s32.totalorder %s32, 0
        // Predicated region
        $region53: #{tpu_custom_call.1} parent=35 // pred_check
          %p353 = pneg %p352
        $region54: #{tpu_custom_call.1} parent=35 // pred_check_branch
          %355 = sbr.rel (%p353) target = $region56
        $region55: #{tpu_custom_call.1} parent=35 // pred_region
          %356 = vst [vmem:[#allocation2] sm:$0xff] 0.0
          %357 = vst [vmem:[#allocation2 + $0x8] sm:$0xff] 0.0
          %358 = vst [vmem:[#allocation2 + $0x10] sm:$0xff] 0.0
          %359 = vst [vmem:[#allocation2 + $0x18] sm:$0xff] 0.0
          %360 = vst [vmem:[#allocation2 + $0x20] sm:$0xff] 0.0
          %361 = vst [vmem:[#allocation2 + $0x28] sm:$0xff] 0.0
          %362 = vst [vmem:[#allocation2 + $0x30] sm:$0xff] 0.0
          %363 = vst [vmem:[#allocation2 + $0x38] sm:$0xff] 0.0
        $region56: #{tpu_custom_call.1} parent=35 // pred_fallthru
          _
        %v364 = vld [vmem:[%s280] sm:$0xff]
        %v365 = vld [vmem:[%s280 + $0x8] sm:$0xff]
        %v366 = vld [vmem:[%s280 + $0x10] sm:$0xff]
        %v367 = vld [vmem:[%s280 + $0x18] sm:$0xff]
        %v368 = vld [vmem:[%s280 + $0x20] sm:$0xff]
        %v369 = vld [vmem:[%s280 + $0x28] sm:$0xff]
        %v370 = vld [vmem:[%s280 + $0x30] sm:$0xff]
        %v371 = vld [vmem:[%s280 + $0x38] sm:$0xff]
        %v372 = vld [vmem:[%s289] sm:$0xff]
        %v373 = vld [vmem:[%s289 + $0x8] sm:$0xff]
        %v374 = vld [vmem:[%s289 + $0x10] sm:$0xff]
        %v375 = vld [vmem:[%s289 + $0x18] sm:$0xff]
        %v376 = vld [vmem:[%s289 + $0x20] sm:$0xff]
        %v377 = vld [vmem:[%s289 + $0x28] sm:$0xff]
        %v378 = vld [vmem:[%s289 + $0x30] sm:$0xff]
        %v379 = vld [vmem:[%s289 + $0x38] sm:$0xff]
        %v380 = vld [vmem:[%s289 + $0x40] sm:$0xff]
        %v381 = vld [vmem:[%s289 + $0x48] sm:$0xff]
        %v382 = vld [vmem:[%s289 + $0x50] sm:$0xff]
        %v383 = vld [vmem:[%s289 + $0x58] sm:$0xff]
        %v384 = vld [vmem:[%s289 + $0x60] sm:$0xff]
        %v385 = vld [vmem:[%s289 + $0x68] sm:$0xff]
        %v386 = vld [vmem:[%s289 + $0x70] sm:$0xff]
        %v387 = vld [vmem:[%s289 + $0x78] sm:$0xff]
        %v388 = vld [vmem:[%s289 + $0x80] sm:$0xff]
        %v389 = vld [vmem:[%s289 + $0x88] sm:$0xff]
        %v390 = vld [vmem:[%s289 + $0x90] sm:$0xff]
        %v391 = vld [vmem:[%s289 + $0x98] sm:$0xff]
        %v392 = vld [vmem:[%s289 + $0xa0] sm:$0xff]
        %v393 = vld [vmem:[%s289 + $0xa8] sm:$0xff]
        %v394 = vld [vmem:[%s289 + $0xb0] sm:$0xff]
        %v395 = vld [vmem:[%s289 + $0xb8] sm:$0xff]
        %v396 = vld [vmem:[%s289 + $0xc0] sm:$0xff]
        %v397 = vld [vmem:[%s289 + $0xc8] sm:$0xff]
        %v398 = vld [vmem:[%s289 + $0xd0] sm:$0xff]
        %v399 = vld [vmem:[%s289 + $0xd8] sm:$0xff]
        %v400 = vld [vmem:[%s289 + $0xe0] sm:$0xff]
        %v401 = vld [vmem:[%s289 + $0xe8] sm:$0xff]
        %v402 = vld [vmem:[%s289 + $0xf0] sm:$0xff]
        %v403 = vld [vmem:[%s289 + $0xf8] sm:$0xff]
        %v404 = vld [vmem:[%s289 + $0x100] sm:$0xff]
        %v405 = vld [vmem:[%s289 + $0x108] sm:$0xff]
        %v406 = vld [vmem:[%s289 + $0x110] sm:$0xff]
        %v407 = vld [vmem:[%s289 + $0x118] sm:$0xff]
        %v408 = vld [vmem:[%s289 + $0x120] sm:$0xff]
        %v409 = vld [vmem:[%s289 + $0x128] sm:$0xff]
        %v410 = vld [vmem:[%s289 + $0x130] sm:$0xff]
        %v411 = vld [vmem:[%s289 + $0x138] sm:$0xff]
        %v412 = vld [vmem:[%s289 + $0x140] sm:$0xff]
        %v413 = vld [vmem:[%s289 + $0x148] sm:$0xff]
        %v414 = vld [vmem:[%s289 + $0x150] sm:$0xff]
        %v415 = vld [vmem:[%s289 + $0x158] sm:$0xff]
        %v416 = vld [vmem:[%s289 + $0x160] sm:$0xff]
        %v417 = vld [vmem:[%s289 + $0x168] sm:$0xff]
        %v418 = vld [vmem:[%s289 + $0x170] sm:$0xff]
        %v419 = vld [vmem:[%s289 + $0x178] sm:$0xff]
        %v420 = vld [vmem:[%s289 + $0x180] sm:$0xff]
        %v421 = vld [vmem:[%s289 + $0x188] sm:$0xff]
        %v422 = vld [vmem:[%s289 + $0x190] sm:$0xff]
        %v423 = vld [vmem:[%s289 + $0x198] sm:$0xff]
        %v424 = vld [vmem:[%s289 + $0x1a0] sm:$0xff]
        %v425 = vld [vmem:[%s289 + $0x1a8] sm:$0xff]
        %v426 = vld [vmem:[%s289 + $0x1b0] sm:$0xff]
        %v427 = vld [vmem:[%s289 + $0x1b8] sm:$0xff]
        %v428 = vld [vmem:[%s289 + $0x1c0] sm:$0xff]
        %v429 = vld [vmem:[%s289 + $0x1c8] sm:$0xff]
        %v430 = vld [vmem:[%s289 + $0x1d0] sm:$0xff]
        %v431 = vld [vmem:[%s289 + $0x1d8] sm:$0xff]
        %v432 = vld [vmem:[%s289 + $0x1e0] sm:$0xff]
        %v433 = vld [vmem:[%s289 + $0x1e8] sm:$0xff]
        %v434 = vld [vmem:[%s289 + $0x1f0] sm:$0xff]
        %v435 = vld [vmem:[%s289 + $0x1f8] sm:$0xff]
        %436 = vmatprep.subr.mxu0 %v373
        %437 = vmatpush1.msra.mxu0 %v372
        %438 = vmatprep.subr.mxu0 %v375
        %439 = vmatpush1.msra.mxu0 %v374
        %440 = vmatprep.subr.mxu0 %v377
        %441 = vmatpush1.msra.mxu0 %v376
        %442 = vmatprep.subr.mxu0 %v379
        %443 = vmatpush1.msra.mxu0 %v378
        %444 = vmatprep.subr.mxu0 %v381
        %445 = vmatpush1.msra.mxu0 %v380
        %446 = vmatprep.subr.mxu0 %v383
        %447 = vmatpush1.msra.mxu0 %v382
        %448 = vmatprep.subr.mxu0 %v385
        %449 = vmatpush1.msra.mxu0 %v384
        %450 = vmatprep.subr.mxu0 %v387
        %451 = vmatpush1.msra.mxu0 %v386
        %452 = vmatprep.subr.mxu0 %v389
        %453 = vmatpush1.msra.mxu0 %v388
        %454 = vmatprep.subr.mxu0 %v391
        %455 = vmatpush1.msra.mxu0 %v390
        %456 = vmatprep.subr.mxu0 %v393
        %457 = vmatpush1.msra.mxu0 %v392
        %458 = vmatprep.subr.mxu0 %v395
        %459 = vmatpush1.msra.mxu0 %v394
        %460 = vmatprep.subr.mxu0 %v397
        %461 = vmatpush1.msra.mxu0 %v396
        %462 = vmatprep.subr.mxu0 %v399
        %463 = vmatpush1.msra.mxu0 %v398
        %464 = vmatprep.subr.mxu0 %v401
        %465 = vmatpush1.msra.mxu0 %v400
        %466 = vmatprep.subr.mxu0 %v403
        %467 = vmatpush1.msra.mxu0 %v402
        %468 = vmatprep.subr.mxu0 %v405
        %469 = vmatpush1.msra.mxu0 %v404
        %470 = vmatprep.subr.mxu0 %v407
        %471 = vmatpush1.msra.mxu0 %v406
        %472 = vmatprep.subr.mxu0 %v409
        %473 = vmatpush1.msra.mxu0 %v408
        %474 = vmatprep.subr.mxu0 %v411
        %475 = vmatpush1.msra.mxu0 %v410
        %476 = vmatprep.subr.mxu0 %v413
        %477 = vmatpush1.msra.mxu0 %v412
        %478 = vmatprep.subr.mxu0 %v415
        %479 = vmatpush1.msra.mxu0 %v414
        %480 = vmatprep.subr.mxu0 %v417
        %481 = vmatpush1.msra.mxu0 %v416
        %482 = vmatprep.subr.mxu0 %v419
        %483 = vmatpush1.msra.mxu0 %v418
        %484 = vmatprep.subr.mxu0 %v421
        %485 = vmatpush1.msra.mxu0 %v420
        %486 = vmatprep.subr.mxu0 %v423
        %487 = vmatpush1.msra.mxu0 %v422
        %488 = vmatprep.subr.mxu0 %v425
        %489 = vmatpush1.msra.mxu0 %v424
        %490 = vmatprep.subr.mxu0 %v427
        %491 = vmatpush1.msra.mxu0 %v426
        %492 = vmatprep.subr.mxu0 %v429
        %493 = vmatpush1.msra.mxu0 %v428
        %494 = vmatprep.subr.mxu0 %v431
        %495 = vmatpush1.msra.mxu0 %v430
        %496 = vmatprep.subr.mxu0 %v433
        %497 = vmatpush1.msra.mxu0 %v432
        %498 = vmatprep.subr.mxu0 %v435
        %499 = vmatpush1.msra.mxu0 %v434
        %500 = vmatprep.mubr.f32.mxu0 %v365
        %501 = vmatmul.mubr.f32.gmra.mrb[0].mxu0 %v364
        %v502 = vpop.f32.mrb[0].mxu0
        %v503 = vadd.f32 0.0, %v502
        %v504 = vpop.f32.mrb[0].mxu0
        %v505 = vadd.f32 0.0, %v504
        %506 = vmatprep.mubr.f32.mxu0 %v367
        %507 = vmatmul.mubr.f32.gmra.mrb[0].mxu0 %v366
        %v508 = vpop.f32.mrb[0].mxu0
        %v509 = vadd.f32 0.0, %v508
        %v510 = vpop.f32.mrb[0].mxu0
        %v511 = vadd.f32 0.0, %v510
        %512 = vmatprep.mubr.f32.mxu0 %v369
        %513 = vmatmul.mubr.f32.gmra.mrb[0].mxu0 %v368
        %v514 = vpop.f32.mrb[0].mxu0
        %v515 = vadd.f32 0.0, %v514
        %v516 = vpop.f32.mrb[0].mxu0
        %v517 = vadd.f32 0.0, %v516
        %518 = vmatprep.mubr.f32.mxu0 %v371
        %519 = vmatmul.mubr.f32.gmra.mrb[0].mxu0 %v370
        %v520 = vpop.f32.mrb[0].mxu0
        %v521 = vadd.f32 0.0, %v520
        %v522 = vpop.f32.mrb[0].mxu0
        %v523 = vadd.f32 0.0, %v522
        %524 = vdwg.mxu0
        %v525 = vld [vmem:[%s298] sm:$0xff]
        %v526 = vld [vmem:[%s298 + $0x8] sm:$0xff]
        %v527 = vld [vmem:[%s298 + $0x10] sm:$0xff]
        %v528 = vld [vmem:[%s298 + $0x18] sm:$0xff]
        %v529 = vld [vmem:[%s298 + $0x20] sm:$0xff]
        %v530 = vld [vmem:[%s298 + $0x28] sm:$0xff]
        %v531 = vld [vmem:[%s298 + $0x30] sm:$0xff]
        %v532 = vld [vmem:[%s298 + $0x38] sm:$0xff]
        %v533 = vld [vmem:[%s298 + $0x40] sm:$0xff]
        %v534 = vld [vmem:[%s298 + $0x48] sm:$0xff]
        %v535 = vld [vmem:[%s298 + $0x50] sm:$0xff]
        %v536 = vld [vmem:[%s298 + $0x58] sm:$0xff]
        %v537 = vld [vmem:[%s298 + $0x60] sm:$0xff]
        %v538 = vld [vmem:[%s298 + $0x68] sm:$0xff]
        %v539 = vld [vmem:[%s298 + $0x70] sm:$0xff]
        %v540 = vld [vmem:[%s298 + $0x78] sm:$0xff]
        %v541 = vld [vmem:[%s298 + $0x80] sm:$0xff]
        %v542 = vld [vmem:[%s298 + $0x88] sm:$0xff]
        %v543 = vld [vmem:[%s298 + $0x90] sm:$0xff]
        %v544 = vld [vmem:[%s298 + $0x98] sm:$0xff]
        %v545 = vld [vmem:[%s298 + $0xa0] sm:$0xff]
        %v546 = vld [vmem:[%s298 + $0xa8] sm:$0xff]
        %v547 = vld [vmem:[%s298 + $0xb0] sm:$0xff]
        %v548 = vld [vmem:[%s298 + $0xb8] sm:$0xff]
        %v549 = vld [vmem:[%s298 + $0xc0] sm:$0xff]
        %v550 = vld [vmem:[%s298 + $0xc8] sm:$0xff]
        %v551 = vld [vmem:[%s298 + $0xd0] sm:$0xff]
        %v552 = vld [vmem:[%s298 + $0xd8] sm:$0xff]
        %v553 = vld [vmem:[%s298 + $0xe0] sm:$0xff]
        %v554 = vld [vmem:[%s298 + $0xe8] sm:$0xff]
        %v555 = vld [vmem:[%s298 + $0xf0] sm:$0xff]
        %v556 = vld [vmem:[%s298 + $0xf8] sm:$0xff]
        %v557 = vld [vmem:[%s298 + $0x100] sm:$0xff]
        %v558 = vld [vmem:[%s298 + $0x108] sm:$0xff]
        %v559 = vld [vmem:[%s298 + $0x110] sm:$0xff]
        %v560 = vld [vmem:[%s298 + $0x118] sm:$0xff]
        %v561 = vld [vmem:[%s298 + $0x120] sm:$0xff]
        %v562 = vld [vmem:[%s298 + $0x128] sm:$0xff]
        %v563 = vld [vmem:[%s298 + $0x130] sm:$0xff]
        %v564 = vld [vmem:[%s298 + $0x138] sm:$0xff]
        %v565 = vld [vmem:[%s298 + $0x140] sm:$0xff]
        %v566 = vld [vmem:[%s298 + $0x148] sm:$0xff]
        %v567 = vld [vmem:[%s298 + $0x150] sm:$0xff]
        %v568 = vld [vmem:[%s298 + $0x158] sm:$0xff]
        %v569 = vld [vmem:[%s298 + $0x160] sm:$0xff]
        %v570 = vld [vmem:[%s298 + $0x168] sm:$0xff]
        %v571 = vld [vmem:[%s298 + $0x170] sm:$0xff]
        %v572 = vld [vmem:[%s298 + $0x178] sm:$0xff]
        %v573 = vld [vmem:[%s298 + $0x180] sm:$0xff]
        %v574 = vld [vmem:[%s298 + $0x188] sm:$0xff]
        %v575 = vld [vmem:[%s298 + $0x190] sm:$0xff]
        %v576 = vld [vmem:[%s298 + $0x198] sm:$0xff]
        %v577 = vld [vmem:[%s298 + $0x1a0] sm:$0xff]
        %v578 = vld [vmem:[%s298 + $0x1a8] sm:$0xff]
        %v579 = vld [vmem:[%s298 + $0x1b0] sm:$0xff]
        %v580 = vld [vmem:[%s298 + $0x1b8] sm:$0xff]
        %v581 = vld [vmem:[%s298 + $0x1c0] sm:$0xff]
        %v582 = vld [vmem:[%s298 + $0x1c8] sm:$0xff]
        %v583 = vld [vmem:[%s298 + $0x1d0] sm:$0xff]
        %v584 = vld [vmem:[%s298 + $0x1d8] sm:$0xff]
        %v585 = vld [vmem:[%s298 + $0x1e0] sm:$0xff]
        %v586 = vld [vmem:[%s298 + $0x1e8] sm:$0xff]
        %v587 = vld [vmem:[%s298 + $0x1f0] sm:$0xff]
        %v588 = vld [vmem:[%s298 + $0x1f8] sm:$0xff]
        %589 = vmatprep.subr.mxu0 %v526
        %590 = vmatpush1.msra.mxu0 %v525
        %591 = vmatprep.subr.mxu0 %v528
        %592 = vmatpush1.msra.mxu0 %v527
        %593 = vmatprep.subr.mxu0 %v530
        %594 = vmatpush1.msra.mxu0 %v529
        %595 = vmatprep.subr.mxu0 %v532
        %596 = vmatpush1.msra.mxu0 %v531
        %597 = vmatprep.subr.mxu0 %v534
        %598 = vmatpush1.msra.mxu0 %v533
        %599 = vmatprep.subr.mxu0 %v536
        %600 = vmatpush1.msra.mxu0 %v535
        %601 = vmatprep.subr.mxu0 %v538
        %602 = vmatpush1.msra.mxu0 %v537
        %603 = vmatprep.subr.mxu0 %v540
        %604 = vmatpush1.msra.mxu0 %v539
        %605 = vmatprep.subr.mxu0 %v542
        %606 = vmatpush1.msra.mxu0 %v541
        %607 = vmatprep.subr.mxu0 %v544
        %608 = vmatpush1.msra.mxu0 %v543
        %609 = vmatprep.subr.mxu0 %v546
        %610 = vmatpush1.msra.mxu0 %v545
        %611 = vmatprep.subr.mxu0 %v548
        %612 = vmatpush1.msra.mxu0 %v547
        %613 = vmatprep.subr.mxu0 %v550
        %614 = vmatpush1.msra.mxu0 %v549
        %615 = vmatprep.subr.mxu0 %v552
        %616 = vmatpush1.msra.mxu0 %v551
        %617 = vmatprep.subr.mxu0 %v554
        %618 = vmatpush1.msra.mxu0 %v553
        %619 = vmatprep.subr.mxu0 %v556
        %620 = vmatpush1.msra.mxu0 %v555
        %621 = vmatprep.subr.mxu0 %v558
        %622 = vmatpush1.msra.mxu0 %v557
        %623 = vmatprep.subr.mxu0 %v560
        %624 = vmatpush1.msra.mxu0 %v559
        %625 = vmatprep.subr.mxu0 %v562
        %626 = vmatpush1.msra.mxu0 %v561
        %627 = vmatprep.subr.mxu0 %v564
        %628 = vmatpush1.msra.mxu0 %v563
        %629 = vmatprep.subr.mxu0 %v566
        %630 = vmatpush1.msra.mxu0 %v565
        %631 = vmatprep.subr.mxu0 %v568
        %632 = vmatpush1.msra.mxu0 %v567
        %633 = vmatprep.subr.mxu0 %v570
        %634 = vmatpush1.msra.mxu0 %v569
        %635 = vmatprep.subr.mxu0 %v572
        %636 = vmatpush1.msra.mxu0 %v571
        %637 = vmatprep.subr.mxu0 %v574
        %638 = vmatpush1.msra.mxu0 %v573
        %639 = vmatprep.subr.mxu0 %v576
        %640 = vmatpush1.msra.mxu0 %v575
        %641 = vmatprep.subr.mxu0 %v578
        %642 = vmatpush1.msra.mxu0 %v577
        %643 = vmatprep.subr.mxu0 %v580
        %644 = vmatpush1.msra.mxu0 %v579
        %645 = vmatprep.subr.mxu0 %v582
        %646 = vmatpush1.msra.mxu0 %v581
        %647 = vmatprep.subr.mxu0 %v584
        %648 = vmatpush1.msra.mxu0 %v583
        %649 = vmatprep.subr.mxu0 %v586
        %650 = vmatpush1.msra.mxu0 %v585
        %651 = vmatprep.subr.mxu0 %v588
        %652 = vmatpush1.msra.mxu0 %v587
        %653 = vmatprep.mubr.f32.mxu0 %v365
        %654 = vmatmul.mubr.f32.gmra.mrb[0].mxu0 %v364
        %v655 = vpop.f32.mrb[0].mxu0
        %v656 = vadd.f32 0.0, %v655
        %v657 = vpop.f32.mrb[0].mxu0
        %v658 = vadd.f32 0.0, %v657
        %659 = vmatprep.mubr.f32.mxu0 %v367
        %660 = vmatmul.mubr.f32.gmra.mrb[0].mxu0 %v366
        %v661 = vpop.f32.mrb[0].mxu0
        %v662 = vadd.f32 0.0, %v661
        %v663 = vpop.f32.mrb[0].mxu0
        %v664 = vadd.f32 0.0, %v663
        %665 = vmatprep.mubr.f32.mxu0 %v369
        %666 = vmatmul.mubr.f32.gmra.mrb[0].mxu0 %v368
        %v667 = vpop.f32.mrb[0].mxu0
        %v668 = vadd.f32 0.0, %v667
        %v669 = vpop.f32.mrb[0].mxu0
        %v670 = vadd.f32 0.0, %v669
        %671 = vmatprep.mubr.f32.mxu0 %v371
        %672 = vmatmul.mubr.f32.gmra.mrb[0].mxu0 %v370
        %v673 = vpop.f32.mrb[0].mxu0
        %v674 = vadd.f32 0.0, %v673
        %v675 = vpop.f32.mrb[0].mxu0
        %v676 = vadd.f32 0.0, %v675
        %677 = vdwg.mxu0
        %v678 = vsub.f32 0.0, %v503
        %v679 = vsub.f32 0.0, %v505
        %v680 = vsub.f32 0.0, %v509
        %v681 = vsub.f32 0.0, %v511
        %v682 = vsub.f32 0.0, %v515
        %v683 = vsub.f32 0.0, %v517
        %v684 = vsub.f32 0.0, %v521
        %v685 = vsub.f32 0.0, %v523
        %v686 = vmin.f32 %v678, 60.0
        %v687 = vmin.f32 %v679, 60.0
        %v688 = vmin.f32 %v680, 60.0
        %v689 = vmin.f32 %v681, 60.0
        %v690 = vmin.f32 %v682, 60.0
        %v691 = vmin.f32 %v683, 60.0
        %v692 = vmin.f32 %v684, 60.0
        %v693 = vmin.f32 %v685, 60.0
        %v694 = vmul.f32 %v686, 1.442695
        %v695 = vpow.pop %v694
        %v696 = vmul.f32 %v687, 1.442695
        %v697 = vpow.pop %v696
        %v698 = vmul.f32 %v688, 1.442695
        %v699 = vpow.pop %v698
        %v700 = vmul.f32 %v689, 1.442695
        %v701 = vpow.pop %v700
        %v702 = vmul.f32 %v690, 1.442695
        %v703 = vpow.pop %v702
        %v704 = vmul.f32 %v691, 1.442695
        %v705 = vpow.pop %v704
        %v706 = vmul.f32 %v692, 1.442695
        %v707 = vpow.pop %v706
        %v708 = vmul.f32 %v693, 1.442695
        %v709 = vpow.pop %v708
        %v710 = vadd.f32 %v695, 1.0
        %v711 = vadd.f32 %v697, 1.0
        %v712 = vadd.f32 %v699, 1.0
        %v713 = vadd.f32 %v701, 1.0
        %v714 = vadd.f32 %v703, 1.0
        %v715 = vadd.f32 %v705, 1.0
        %v716 = vadd.f32 %v707, 1.0
        %v717 = vadd.f32 %v709, 1.0
        %v718 = vrcp.pop %v710
        %v719 = vrcp.pop %v711
        %v720 = vrcp.pop %v712
        %v721 = vrcp.pop %v713
        %v722 = vrcp.pop %v714
        %v723 = vrcp.pop %v715
        %v724 = vrcp.pop %v716
        %v725 = vrcp.pop %v717
        %v726 = vmul.f32 %v503, %v718
        %v727 = vmul.f32 %v505, %v719
        %v728 = vmul.f32 %v509, %v720
        %v729 = vmul.f32 %v511, %v721
        %v730 = vmul.f32 %v515, %v722
        %v731 = vmul.f32 %v517, %v723
        %v732 = vmul.f32 %v521, %v724
        %v733 = vmul.f32 %v523, %v725
        %v734 = vmul.f32 %v726, %v656
        %v735 = vmul.f32 %v727, %v658
        %v736 = vmul.f32 %v728, %v662
        %v737 = vmul.f32 %v729, %v664
        %v738 = vmul.f32 %v730, %v668
        %v739 = vmul.f32 %v731, %v670
        %v740 = vmul.f32 %v732, %v674
        %v741 = vmul.f32 %v733, %v676
        %v742 = vld [vmem:[#allocation2] sm:$0xff]
        %v743 = vld [vmem:[#allocation2 + $0x8] sm:$0xff]
        %v744 = vld [vmem:[#allocation2 + $0x10] sm:$0xff]
        %v745 = vld [vmem:[#allocation2 + $0x18] sm:$0xff]
        %v746 = vld [vmem:[#allocation2 + $0x20] sm:$0xff]
        %v747 = vld [vmem:[#allocation2 + $0x28] sm:$0xff]
        %v748 = vld [vmem:[#allocation2 + $0x30] sm:$0xff]
        %v749 = vld [vmem:[#allocation2 + $0x38] sm:$0xff]
        %v750 = vld [vmem:[%s307] sm:$0xff]
        %v751 = vld [vmem:[%s307 + $0x8] sm:$0xff]
        %v752 = vld [vmem:[%s307 + $0x10] sm:$0xff]
        %v753 = vld [vmem:[%s307 + $0x18] sm:$0xff]
        %v754 = vld [vmem:[%s307 + $0x20] sm:$0xff]
        %v755 = vld [vmem:[%s307 + $0x28] sm:$0xff]
        %v756 = vld [vmem:[%s307 + $0x30] sm:$0xff]
        %v757 = vld [vmem:[%s307 + $0x38] sm:$0xff]
        %v758 = vld [vmem:[%s307 + $0x40] sm:$0xff]
        %v759 = vld [vmem:[%s307 + $0x48] sm:$0xff]
        %v760 = vld [vmem:[%s307 + $0x50] sm:$0xff]
        %v761 = vld [vmem:[%s307 + $0x58] sm:$0xff]
        %v762 = vld [vmem:[%s307 + $0x60] sm:$0xff]
        %v763 = vld [vmem:[%s307 + $0x68] sm:$0xff]
        %v764 = vld [vmem:[%s307 + $0x70] sm:$0xff]
        %v765 = vld [vmem:[%s307 + $0x78] sm:$0xff]
        %v766 = vld [vmem:[%s307 + $0x80] sm:$0xff]
        %v767 = vld [vmem:[%s307 + $0x88] sm:$0xff]
        %v768 = vld [vmem:[%s307 + $0x90] sm:$0xff]
        %v769 = vld [vmem:[%s307 + $0x98] sm:$0xff]
        %v770 = vld [vmem:[%s307 + $0xa0] sm:$0xff]
        %v771 = vld [vmem:[%s307 + $0xa8] sm:$0xff]
        %v772 = vld [vmem:[%s307 + $0xb0] sm:$0xff]
        %v773 = vld [vmem:[%s307 + $0xb8] sm:$0xff]
        %v774 = vld [vmem:[%s307 + $0xc0] sm:$0xff]
        %v775 = vld [vmem:[%s307 + $0xc8] sm:$0xff]
        %v776 = vld [vmem:[%s307 + $0xd0] sm:$0xff]
        %v777 = vld [vmem:[%s307 + $0xd8] sm:$0xff]
        %v778 = vld [vmem:[%s307 + $0xe0] sm:$0xff]
        %v779 = vld [vmem:[%s307 + $0xe8] sm:$0xff]
        %v780 = vld [vmem:[%s307 + $0xf0] sm:$0xff]
        %v781 = vld [vmem:[%s307 + $0xf8] sm:$0xff]
        %v782 = vld [vmem:[%s307 + $0x100] sm:$0xff]
        %v783 = vld [vmem:[%s307 + $0x108] sm:$0xff]
        %v784 = vld [vmem:[%s307 + $0x110] sm:$0xff]
        %v785 = vld [vmem:[%s307 + $0x118] sm:$0xff]
        %v786 = vld [vmem:[%s307 + $0x120] sm:$0xff]
        %v787 = vld [vmem:[%s307 + $0x128] sm:$0xff]
        %v788 = vld [vmem:[%s307 + $0x130] sm:$0xff]
        %v789 = vld [vmem:[%s307 + $0x138] sm:$0xff]
        %v790 = vld [vmem:[%s307 + $0x140] sm:$0xff]
        %v791 = vld [vmem:[%s307 + $0x148] sm:$0xff]
        %v792 = vld [vmem:[%s307 + $0x150] sm:$0xff]
        %v793 = vld [vmem:[%s307 + $0x158] sm:$0xff]
        %v794 = vld [vmem:[%s307 + $0x160] sm:$0xff]
        %v795 = vld [vmem:[%s307 + $0x168] sm:$0xff]
        %v796 = vld [vmem:[%s307 + $0x170] sm:$0xff]
        %v797 = vld [vmem:[%s307 + $0x178] sm:$0xff]
        %v798 = vld [vmem:[%s307 + $0x180] sm:$0xff]
        %v799 = vld [vmem:[%s307 + $0x188] sm:$0xff]
        %v800 = vld [vmem:[%s307 + $0x190] sm:$0xff]
        %v801 = vld [vmem:[%s307 + $0x198] sm:$0xff]
        %v802 = vld [vmem:[%s307 + $0x1a0] sm:$0xff]
        %v803 = vld [vmem:[%s307 + $0x1a8] sm:$0xff]
        %v804 = vld [vmem:[%s307 + $0x1b0] sm:$0xff]
        %v805 = vld [vmem:[%s307 + $0x1b8] sm:$0xff]
        %v806 = vld [vmem:[%s307 + $0x1c0] sm:$0xff]
        %v807 = vld [vmem:[%s307 + $0x1c8] sm:$0xff]
        %v808 = vld [vmem:[%s307 + $0x1d0] sm:$0xff]
        %v809 = vld [vmem:[%s307 + $0x1d8] sm:$0xff]
        %v810 = vld [vmem:[%s307 + $0x1e0] sm:$0xff]
        %v811 = vld [vmem:[%s307 + $0x1e8] sm:$0xff]
        %v812 = vld [vmem:[%s307 + $0x1f0] sm:$0xff]
        %v813 = vld [vmem:[%s307 + $0x1f8] sm:$0xff]
        %814 = vmatprep.subr.mxu0 %v751
        %815 = vmatpush1.msra.mxu0 %v750
        %816 = vmatprep.subr.mxu0 %v753
        %817 = vmatpush1.msra.mxu0 %v752
        %818 = vmatprep.subr.mxu0 %v755
        %819 = vmatpush1.msra.mxu0 %v754
        %820 = vmatprep.subr.mxu0 %v757
        %821 = vmatpush1.msra.mxu0 %v756
        %822 = vmatprep.subr.mxu0 %v759
        %823 = vmatpush1.msra.mxu0 %v758
        %824 = vmatprep.subr.mxu0 %v761
        %825 = vmatpush1.msra.mxu0 %v760
        %826 = vmatprep.subr.mxu0 %v763
        %827 = vmatpush1.msra.mxu0 %v762
        %828 = vmatprep.subr.mxu0 %v765
        %829 = vmatpush1.msra.mxu0 %v764
        %830 = vmatprep.subr.mxu0 %v767
        %831 = vmatpush1.msra.mxu0 %v766
        %832 = vmatprep.subr.mxu0 %v769
        %833 = vmatpush1.msra.mxu0 %v768
        %834 = vmatprep.subr.mxu0 %v771
        %835 = vmatpush1.msra.mxu0 %v770
        %836 = vmatprep.subr.mxu0 %v773
        %837 = vmatpush1.msra.mxu0 %v772
        %838 = vmatprep.subr.mxu0 %v775
        %839 = vmatpush1.msra.mxu0 %v774
        %840 = vmatprep.subr.mxu0 %v777
        %841 = vmatpush1.msra.mxu0 %v776
        %842 = vmatprep.subr.mxu0 %v779
        %843 = vmatpush1.msra.mxu0 %v778
        %844 = vmatprep.subr.mxu0 %v781
        %845 = vmatpush1.msra.mxu0 %v780
        %846 = vmatprep.subr.mxu0 %v783
        %847 = vmatpush1.msra.mxu0 %v782
        %848 = vmatprep.subr.mxu0 %v785
        %849 = vmatpush1.msra.mxu0 %v784
        %850 = vmatprep.subr.mxu0 %v787
        %851 = vmatpush1.msra.mxu0 %v786
        %852 = vmatprep.subr.mxu0 %v789
        %853 = vmatpush1.msra.mxu0 %v788
        %854 = vmatprep.subr.mxu0 %v791
        %855 = vmatpush1.msra.mxu0 %v790
        %856 = vmatprep.subr.mxu0 %v793
        %857 = vmatpush1.msra.mxu0 %v792
        %858 = vmatprep.subr.mxu0 %v795
        %859 = vmatpush1.msra.mxu0 %v794
        %860 = vmatprep.subr.mxu0 %v797
        %861 = vmatpush1.msra.mxu0 %v796
        %862 = vmatprep.subr.mxu0 %v799
        %863 = vmatpush1.msra.mxu0 %v798
        %864 = vmatprep.subr.mxu0 %v801
        %865 = vmatpush1.msra.mxu0 %v800
        %866 = vmatprep.subr.mxu0 %v803
        %867 = vmatpush1.msra.mxu0 %v802
        %868 = vmatprep.subr.mxu0 %v805
        %869 = vmatpush1.msra.mxu0 %v804
        %870 = vmatprep.subr.mxu0 %v807
        %871 = vmatpush1.msra.mxu0 %v806
        %872 = vmatprep.subr.mxu0 %v809
        %873 = vmatpush1.msra.mxu0 %v808
        %874 = vmatprep.subr.mxu0 %v811
        %875 = vmatpush1.msra.mxu0 %v810
        %876 = vmatprep.subr.mxu0 %v813
        %877 = vmatpush1.msra.mxu0 %v812
        %878 = vmatprep.mubr.f32.mxu0 %v735
        %879 = vmatmul.mubr.f32.gmra.mrb[0].mxu0 %v734
        %v880 = vpop.f32.mrb[0].mxu0
        %v881 = vadd.f32 0.0, %v880
        %v882 = vpop.f32.mrb[0].mxu0
        %v883 = vadd.f32 0.0, %v882
        %884 = vmatprep.mubr.f32.mxu0 %v737
        %885 = vmatmul.mubr.f32.gmra.mrb[0].mxu0 %v736
        %v886 = vpop.f32.mrb[0].mxu0
        %v887 = vadd.f32 0.0, %v886
        %v888 = vpop.f32.mrb[0].mxu0
        %v889 = vadd.f32 0.0, %v888
        %890 = vmatprep.mubr.f32.mxu0 %v739
        %891 = vmatmul.mubr.f32.gmra.mrb[0].mxu0 %v738
        %v892 = vpop.f32.mrb[0].mxu0
        %v893 = vadd.f32 0.0, %v892
        %v894 = vpop.f32.mrb[0].mxu0
        %v895 = vadd.f32 0.0, %v894
        %896 = vmatprep.mubr.f32.mxu0 %v741
        %897 = vmatmul.mubr.f32.gmra.mrb[0].mxu0 %v740
        %v898 = vpop.f32.mrb[0].mxu0
        %v899 = vadd.f32 0.0, %v898
        %v900 = vpop.f32.mrb[0].mxu0
        %v901 = vadd.f32 0.0, %v900
        %902 = vdwg.mxu0
        %v903 = vadd.f32 %v742, %v881
        %v904 = vadd.f32 %v743, %v883
        %v905 = vadd.f32 %v744, %v887
        %v906 = vadd.f32 %v745, %v889
        %v907 = vadd.f32 %v746, %v893
        %v908 = vadd.f32 %v747, %v895
        %v909 = vadd.f32 %v748, %v899
        %v910 = vadd.f32 %v749, %v901
        %911 = vst [vmem:[#allocation2] sm:$0xff] %v903
        %912 = vst [vmem:[#allocation2 + $0x8] sm:$0xff] %v904
        %913 = vst [vmem:[#allocation2 + $0x10] sm:$0xff] %v905
        %914 = vst [vmem:[#allocation2 + $0x18] sm:$0xff] %v906
        %915 = vst [vmem:[#allocation2 + $0x20] sm:$0xff] %v907
        %916 = vst [vmem:[#allocation2 + $0x28] sm:$0xff] %v908
        %917 = vst [vmem:[#allocation2 + $0x30] sm:$0xff] %v909
        %918 = vst [vmem:[#allocation2 + $0x38] sm:$0xff] %v910
        %p919 = scmp.eq.s32.totalorder %s32, 1
        // Predicated region
        $region57: #{tpu_custom_call.1} parent=35 // pred_check
          %p920 = pneg %p919
        $region58: #{tpu_custom_call.1} parent=35 // pred_check_branch
          %922 = sbr.rel (%p920) target = $region60
        $region59: #{tpu_custom_call.1} parent=35 // pred_region
          %v923 = vld [vmem:[#allocation2] sm:$0xff]
          %v924 = vld [vmem:[#allocation2 + $0x8] sm:$0xff]
          %v925 = vld [vmem:[#allocation2 + $0x10] sm:$0xff]
          %v926 = vld [vmem:[#allocation2 + $0x18] sm:$0xff]
          %v927 = vld [vmem:[#allocation2 + $0x20] sm:$0xff]
          %v928 = vld [vmem:[#allocation2 + $0x28] sm:$0xff]
          %v929 = vld [vmem:[#allocation2 + $0x30] sm:$0xff]
          %v930 = vld [vmem:[#allocation2 + $0x38] sm:$0xff]
          %931 = vst [vmem:[%s346] sm:$0xff] %v923
          %932 = vst [vmem:[%s346 + $0x8] sm:$0xff] %v924
          %933 = vst [vmem:[%s346 + $0x10] sm:$0xff] %v925
          %934 = vst [vmem:[%s346 + $0x18] sm:$0xff] %v926
          %935 = vst [vmem:[%s346 + $0x20] sm:$0xff] %v927
          %936 = vst [vmem:[%s346 + $0x28] sm:$0xff] %v928
          %937 = vst [vmem:[%s346 + $0x30] sm:$0xff] %v929
          %938 = vst [vmem:[%s346 + $0x38] sm:$0xff] %v930
        $region60: #{tpu_custom_call.1} parent=35 // pred_fallthru
          _
        %s939 = sand.u32 %s151, 1
        %s940 = scalar_lea.sflag [#allocation5], %s939
        %s941 = sand.u32 %s151, 1
        %s942 = smul.addr %s941, 64
        %s943 = scalar_lea.vmem [#allocation11], %s942
        // Predicated region
        $region61: #{tpu_custom_call.1} parent=35 // pred_check
          %p944 = pneg %p161
        $region62: #{tpu_custom_call.1} parent=35 // pred_check_branch
          %946 = sbr.rel (%p944) target = $region64
        $region63: #{tpu_custom_call.1} parent=35 // pred_region
          %s947 = smul.u32 4, %s31
          %s949 = ssub.s32 1024, 1024
          %950 = vsyncadd %s940, %s949
          %s951 = smul.addr %s947, 2
          %s952 = smul.addr %s951, 128
          %s953 = scalar_lea.hbm %s4, %s952
          %s954 = sshll.u32 %s943, 4
          %s955 = int_to_ptr.vmem [resolvable:$true] %s954
          %960 = dma.vmem_to_hbm [thread:$0]  %s955, 1024, %s953, %s940, 256, 256, 16
        $region64: #{tpu_custom_call.1} parent=35 // pred_fallthru
          _
      $region36: #{tpu_custom_call.1} parent=5 // pred_fallthru
        _
      %p961 = scmp.le.s32.totalorder 2, %s22
      // Predicated region
      $region65: #{tpu_custom_call.1} parent=5 // pred_check
        %p962 = pneg %p961
      $region66: #{tpu_custom_call.1} parent=5 // pred_check_branch
        %964 = sbr.rel (%p962) target = $region68
      $region67: #{tpu_custom_call.1} parent=5 // pred_region
        %s965 = ssub.s32 %s22, 2
        // Predicated region
        $region69: #{tpu_custom_call.1} parent=67 // pred_check
          %p966 = pneg %p167
        $region70: #{tpu_custom_call.1} parent=67 // pred_check_branch
          %968 = sbr.rel (%p966) target = $region72
        $region71: #{tpu_custom_call.1} parent=67 // pred_region
          %s969 = sand.u32 %s152, 1
          %s970 = scalar_lea.sflag [#allocation5], %s969
          %s971 = sand.u32 %s152, 1
          %s972 = smul.addr %s971, 64
          %s973 = scalar_lea.vmem [#allocation11], %s972
          %974 = dma.done %s970, 1024
        $region72: #{tpu_custom_call.1} parent=67 // pred_fallthru
          _
      $region68: #{tpu_custom_call.1} parent=5 // pred_fallthru
        _
    $region6: #{tpu_custom_call.1} parent=1 // loop_footer
      %s26 = sadd.s32 1, %s22
    $region7: #{tpu_custom_call.1} parent=1 // loop_footer_branch
      %21 = sbr.rel target = $region3
    $region8: #{tpu_custom_call.1} parent=1 // loop_exit
      _
    %975 = vsyncpa [#allocation4], 1
    %s976 = scalar_lea.sflag [#allocation4], 1
    %977 = vsyncpa %s976, 1
    %978 = vsyncpa [#allocation7], 1
    %s979 = scalar_lea.sflag [#allocation7], 1
    %980 = vsyncpa %s979, 1
    %981 = vsyncpa [#allocation10], 1
    %s982 = scalar_lea.sflag [#allocation10], 1
    %983 = vsyncpa %s982, 1
    %984 = vsyncpa [#allocation5], 1
    %s985 = scalar_lea.sflag [#allocation5], 1
    %986 = vsyncpa %s985, 1

</llo_original>
